<compile_context>
chip_gen: v5e
topology: v5e:2x2
jax: 0.10.0
libtpu: 0.0.40
codegen_flags: <defaults>
</compile_context>

<pallas_src>
import jax
import jax.numpy as jnp
from jax.experimental import pallas as pl
from jax.experimental.pallas import tpu as pltpu

WIDTH = 128
IN_FEATURES = 28 * 28          # 784
OUT_FEATURES = 10
OUT_PADDED = 16                # small lane pad for the final store; sliced to 10 outside
N_LAYERS = 9                   # 9 Linear layers; ReLU after the first 8
N_HIDDEN = 7                   # hidden (128,128) layers (layers 2..8)
TB_MAX = 512                   # batch-tile upper bound (HBM-roofline sweet spot)


def mlp_kernel(x_ref, w1_ref, wh_ref, w9_ref, bh_ref, b9_ref, out_ref):
    """One batch tile through the full 9-layer MLP.

    x_ref  : (TB, 784)     f32      w1_ref : (784, 128)  bf16
    wh_ref : (7, 128, 128) bf16     w9_ref : (128, 16)   bf16
    bh_ref : (8, 128)      f32      b9_ref : (1, 16)     f32
    out_ref: (TB, 16)      f32
    """
    # f32 -> bf16 cast of the input tile (one VPU pass, hidden under the input DMA).
    h = x_ref[...].astype(jnp.bfloat16)

    # Layer 1: (TB,784) @ (784,128), f32 accumulation on the MXU, f32 bias + ReLU.
    acc = jnp.dot(h, w1_ref[...], preferred_element_type=jnp.float32) + bh_ref[0:1, :]
    h = jnp.maximum(acc, 0.0).astype(jnp.bfloat16)

    # Hidden layers 2..8 (statically unrolled).
    for i in range(N_HIDDEN):
        acc = (jnp.dot(h, wh_ref[i], preferred_element_type=jnp.float32)
               + bh_ref[i + 1:i + 2, :])
        h = jnp.maximum(acc, 0.0).astype(jnp.bfloat16)

    # Final layer: (TB,128) @ (128,16). Tiny masked store, off the critical path.
    out_ref[...] = jnp.dot(h, w9_ref[...], preferred_element_type=jnp.float32) + b9_ref[...]


def _choose_batch_tile(B: int) -> int:
    """Batch tile: multiple of 16, <= TB_MAX, preferring an exact divisor of B with
    >= 2 grid steps (v7x megacore); falls back to padding the batch."""
    if B <= 16:
        return 16
    cap = min(TB_MAX, (B // 2) // 16 * 16)        # guarantees >= 2 grid steps
    for tb in range(cap, 15, -16):                # biggest exact-divisor tile -> no pad
        if B % tb == 0:
            return tb
    # No exact divisor: smallest tile that still gives >= 2 steps (least padding).
    return min(TB_MAX, ((pl.cdiv(B, 2) + 15) // 16) * 16)


def simple_mlp_relu(x_nchw, weights, biases):
    """Forward pass of SimpleMLP_ReLU.

    x_nchw  : (B, 1, 28, 28) float32
    weights : list of 9 arrays, W_k with shape (in_k, out_k)  [transposed vs. PyTorch]
    biases  : list of 9 arrays, b_k with shape (1, out_k)
    returns : (B, 10) float32
    """
    B = x_nchw.shape[0]
    x = x_nchw.reshape(B, -1).astype(jnp.float32)          # nn.Flatten on NCHW
    assert x.shape[1] == IN_FEATURES

    tb = _choose_batch_tile(B)
    b_pad = pl.cdiv(B, tb) * tb
    if b_pad != B:
        x = jnp.pad(x, ((0, b_pad - B), (0, 0)))           # batch pad only when unavoidable

    # ---- pack parameters (bf16 weights, f32 biases) into 5 VMEM-resident operands ----
    w1 = weights[0].astype(jnp.bfloat16)                                        # (784,128)
    wh = jnp.stack([w.astype(jnp.bfloat16)
                    for w in weights[1:1 + N_HIDDEN]])                          # (7,128,128)
    w9 = jnp.pad(weights[8].astype(jnp.float32),
                 ((0, 0), (0, OUT_PADDED - OUT_FEATURES))).astype(jnp.bfloat16)  # (128,16)
    bh = jnp.stack([b.reshape(-1).astype(jnp.float32) for b in biases[:8]])      # (8,128)
    b9 = jnp.pad(biases[8].reshape(1, -1).astype(jnp.float32),
                 ((0, 0), (0, OUT_PADDED - OUT_FEATURES)))                       # (1,16)

    grid = (b_pad // tb,)
    in_specs = [
        pl.BlockSpec((tb, IN_FEATURES), lambda g: (g, 0)),           # batch-tiled input
        # Constant block indices -> params stay resident in VMEM across all batch tiles.
        pl.BlockSpec((IN_FEATURES, WIDTH), lambda g: (0, 0)),
        pl.BlockSpec((N_HIDDEN, WIDTH, WIDTH), lambda g: (0, 0, 0)),
        pl.BlockSpec((WIDTH, OUT_PADDED), lambda g: (0, 0)),
        pl.BlockSpec((8, WIDTH), lambda g: (0, 0)),
        pl.BlockSpec((1, OUT_PADDED), lambda g: (0, 0)),
    ]
    out_spec = pl.BlockSpec((tb, OUT_PADDED), lambda g: (g, 0))

    param_bytes = sum(int(a.size) * a.dtype.itemsize for a in (w1, wh, w9, bh, b9))
    flops = 2 * b_pad * (IN_FEATURES * WIDTH + N_HIDDEN * WIDTH * WIDTH
                         + WIDTH * OUT_PADDED)
    bytes_accessed = (b_pad * IN_FEATURES * 4          # input stream (f32, no pad copy)
                      + param_bytes                    # weights + biases (read once)
                      + b_pad * OUT_PADDED * 4)        # shrunken output stream

    out = pl.pallas_call(
        mlp_kernel,
        out_shape=jax.ShapeDtypeStruct((b_pad, OUT_PADDED), jnp.float32),
        grid=grid,
        in_specs=in_specs,
        out_specs=out_spec,
        compiler_params=pltpu.CompilerParams(
            dimension_semantics=("parallel",),          # shards batch tiles across TCs (v7x)
            vmem_limit_bytes=16 << 20,                  # actual footprint ~5 MiB at TB=512
        ),
        cost_estimate=pl.CostEstimate(
            flops=flops, transcendentals=0, bytes_accessed=bytes_accessed),
    )(x, w1, wh, w9, bh, b9)

    return out[:B, :OUT_FEATURES]


def init_params(key):
    """Deterministic init mimicking nn.Linear defaults: U(-1/sqrt(fan_in), +1/sqrt(fan_in))."""
    dims = [IN_FEATURES] + [WIDTH] * 8 + [OUT_FEATURES]
    weights, biases = [], []
    for i in range(N_LAYERS):
        fan_in, fan_out = dims[i], dims[i + 1]
        key, kw, kb = jax.random.split(key, 3)
        bound = 1.0 / jnp.sqrt(jnp.float32(fan_in))
        # Stored as (in, out): transpose of PyTorch's (out, in) weight layout.
        w = jax.random.uniform(kw, (fan_in, fan_out), jnp.float32, -bound, bound)
        b = jax.random.uniform(kb, (1, fan_out), jnp.float32, -bound, bound)
        weights.append(w)
        biases.append(b)
    return weights, biases


def reference_forward(x_nchw, weights, biases, *, bf16=True):
    """Plain-JAX reference. bf16=True mirrors the kernel's bf16-matmul / f32-accumulate path."""
    h = x_nchw.reshape(x_nchw.shape[0], -1).astype(jnp.float32)
    for i, (w, b) in enumerate(zip(weights, biases)):
        if bf16:
            h = jnp.dot(h.astype(jnp.bfloat16), w.astype(jnp.bfloat16),
                        preferred_element_type=jnp.float32) + b
        else:
            h = h @ w + b
        if i < N_LAYERS - 1:
            h = jnp.maximum(h, 0.0)
    return h


if __name__ == "__main__":
    key = jax.random.PRNGKey(0)
    key, kx = jax.random.split(key)

    batch = 2
    x = jax.random.normal(kx, (batch, 1, 28, 28), jnp.float32)  # NCHW like PyTorch

    weights, biases = init_params(key)

    out = simple_mlp_relu(x, weights, biases)
    out = jax.block_until_ready(out)
    assert out.shape == (batch, OUT_FEATURES)

    # Tight check vs. a bf16-matmul reference (same numerics as the kernel).
    ref_bf16 = reference_forward(x, weights, biases, bf16=True)
    assert jnp.allclose(out, ref_bf16, atol=2e-2, rtol=2e-2), "mismatch vs bf16 reference"

    # Loose check vs. the exact f32 reference (bf16 weights introduce ~1% relative error).
    ref_f32 = reference_forward(x, weights, biases, bf16=False)
    assert jnp.allclose(out, ref_f32, atol=1e-1, rtol=1e-1), "mismatch vs f32 reference"

    print("KERNEL_OK")
</pallas_src>

<mosaic_0001>
module attributes {stable_mosaic.version = 11 : i64} {
  func.func @mlp_kernel(%arg0: i32, %arg1: memref<16x784xf32, #tpu.memory_space<vmem>>, %arg2: memref<784x128xbf16, #tpu.memory_space<vmem>>, %arg3: memref<7x128x128xbf16, #tpu.memory_space<vmem>>, %arg4: memref<128x16xbf16, #tpu.memory_space<vmem>>, %arg5: memref<8x128xf32, #tpu.memory_space<vmem>>, %arg6: memref<1x16xf32, #tpu.memory_space<vmem>>, %arg7: memref<16x16xf32, #tpu.memory_space<vmem>>) attributes {dimension_semantics = [#tpu.dimension_semantics<parallel>], iteration_bounds = array<i64: 1>, scalar_prefetch = 0 : i64, scratch_operands = 0 : i64, tpu.core_type = #tpu.core_type<tc>, window_params = [{transform_indices = @transform_0, window_bounds = array<i64: 16, 784>}, {pipeline_mode = #tpu.pipeline_mode<synchronous>, transform_indices = @transform_1, window_bounds = array<i64: 784, 128>}, {pipeline_mode = #tpu.pipeline_mode<synchronous>, transform_indices = @transform_2, window_bounds = array<i64: 7, 128, 128>}, {pipeline_mode = #tpu.pipeline_mode<synchronous>, transform_indices = @transform_3, window_bounds = array<i64: 128, 16>}, {pipeline_mode = #tpu.pipeline_mode<synchronous>, transform_indices = @transform_4, window_bounds = array<i64: 8, 128>}, {pipeline_mode = #tpu.pipeline_mode<synchronous>, transform_indices = @transform_5, window_bounds = array<i64: 1, 16>}, {transform_indices = @transform_6, window_bounds = array<i64: 16, 16>}]} {
    %c0 = arith.constant 0 : index
    %c0_0 = arith.constant 0 : index
    %0 = vector.load %arg1[%c0, %c0_0] : memref<16x784xf32, #tpu.memory_space<vmem>>, vector<16x784xf32>
    %1 = arith.truncf %0 : vector<16x784xf32> to vector<16x784xbf16>
    %c0_1 = arith.constant 0 : index
    %c0_2 = arith.constant 0 : index
    %2 = vector.load %arg2[%c0_1, %c0_2] : memref<784x128xbf16, #tpu.memory_space<vmem>>, vector<784x128xbf16>
    %cst = arith.constant dense<0.000000e+00> : vector<16x128xf32>
    %3 = tpu.matmul %1, %2, %cst {dimension_numbers = #tpu.dot_dimension_numbers<[1], [0], [0], [1], [0, 0, 1, 1], [], []>} : vector<16x784xbf16>, vector<784x128xbf16>, vector<16x128xf32> -> vector<16x128xf32>
    %c0_3 = arith.constant 0 : index
    %c0_4 = arith.constant 0 : index
    %4 = vector.load %arg5[%c0_3, %c0_4] : memref<8x128xf32, #tpu.memory_space<vmem>>, vector<1x128xf32>
    %5 = vector.broadcast %4 : vector<1x128xf32> to vector<16x128xf32>
    %6 = arith.addf %3, %5 : vector<16x128xf32>
    %cst_5 = arith.constant 0.000000e+00 : f32
    %7 = vector.broadcast %cst_5 : f32 to vector<16x128xf32>
    %8 = arith.maximumf %6, %7 : vector<16x128xf32>
    %9 = arith.truncf %8 : vector<16x128xf32> to vector<16x128xbf16>
    %c0_6 = arith.constant 0 : index
    %c0_7 = arith.constant 0 : index
    %c0_8 = arith.constant 0 : index
    %10 = vector.load %arg3[%c0_6, %c0_7, %c0_8] : memref<7x128x128xbf16, #tpu.memory_space<vmem>>, vector<1x128x128xbf16>
    %11 = vector.shape_cast %10 : vector<1x128x128xbf16> to vector<128x128xbf16>
    %cst_9 = arith.constant dense<0.000000e+00> : vector<16x128xf32>
    %12 = tpu.matmul %9, %11, %cst_9 {dimension_numbers = #tpu.dot_dimension_numbers<[1], [0], [0], [1], [0, 0, 1, 1], [], []>} : vector<16x128xbf16>, vector<128x128xbf16>, vector<16x128xf32> -> vector<16x128xf32>
    %c1 = arith.constant 1 : index
    %c0_10 = arith.constant 0 : index
    %13 = vector.load %arg5[%c1, %c0_10] : memref<8x128xf32, #tpu.memory_space<vmem>>, vector<1x128xf32>
    %14 = vector.broadcast %13 : vector<1x128xf32> to vector<16x128xf32>
    %15 = arith.addf %12, %14 : vector<16x128xf32>
    %cst_11 = arith.constant 0.000000e+00 : f32
    %16 = vector.broadcast %cst_11 : f32 to vector<16x128xf32>
    %17 = arith.maximumf %15, %16 : vector<16x128xf32>
    %18 = arith.truncf %17 : vector<16x128xf32> to vector<16x128xbf16>
    %c1_12 = arith.constant 1 : index
    %c0_13 = arith.constant 0 : index
    %c0_14 = arith.constant 0 : index
    %19 = vector.load %arg3[%c1_12, %c0_13, %c0_14] : memref<7x128x128xbf16, #tpu.memory_space<vmem>>, vector<1x128x128xbf16>
    %20 = vector.shape_cast %19 : vector<1x128x128xbf16> to vector<128x128xbf16>
    %cst_15 = arith.constant dense<0.000000e+00> : vector<16x128xf32>
    %21 = tpu.matmul %18, %20, %cst_15 {dimension_numbers = #tpu.dot_dimension_numbers<[1], [0], [0], [1], [0, 0, 1, 1], [], []>} : vector<16x128xbf16>, vector<128x128xbf16>, vector<16x128xf32> -> vector<16x128xf32>
    %c2 = arith.constant 2 : index
    %c0_16 = arith.constant 0 : index
    %22 = vector.load %arg5[%c2, %c0_16] : memref<8x128xf32, #tpu.memory_space<vmem>>, vector<1x128xf32>
    %23 = vector.broadcast %22 : vector<1x128xf32> to vector<16x128xf32>
    %24 = arith.addf %21, %23 : vector<16x128xf32>
    %cst_17 = arith.constant 0.000000e+00 : f32
    %25 = vector.broadcast %cst_17 : f32 to vector<16x128xf32>
    %26 = arith.maximumf %24, %25 : vector<16x128xf32>
    %27 = arith.truncf %26 : vector<16x128xf32> to vector<16x128xbf16>
    %c2_18 = arith.constant 2 : index
    %c0_19 = arith.constant 0 : index
    %c0_20 = arith.constant 0 : index
    %28 = vector.load %arg3[%c2_18, %c0_19, %c0_20] : memref<7x128x128xbf16, #tpu.memory_space<vmem>>, vector<1x128x128xbf16>
    %29 = vector.shape_cast %28 : vector<1x128x128xbf16> to vector<128x128xbf16>
    %cst_21 = arith.constant dense<0.000000e+00> : vector<16x128xf32>
    %30 = tpu.matmul %27, %29, %cst_21 {dimension_numbers = #tpu.dot_dimension_numbers<[1], [0], [0], [1], [0, 0, 1, 1], [], []>} : vector<16x128xbf16>, vector<128x128xbf16>, vector<16x128xf32> -> vector<16x128xf32>
    %c3 = arith.constant 3 : index
    %c0_22 = arith.constant 0 : index
    %31 = vector.load %arg5[%c3, %c0_22] : memref<8x128xf32, #tpu.memory_space<vmem>>, vector<1x128xf32>
    %32 = vector.broadcast %31 : vector<1x128xf32> to vector<16x128xf32>
    %33 = arith.addf %30, %32 : vector<16x128xf32>
    %cst_23 = arith.constant 0.000000e+00 : f32
    %34 = vector.broadcast %cst_23 : f32 to vector<16x128xf32>
    %35 = arith.maximumf %33, %34 : vector<16x128xf32>
    %36 = arith.truncf %35 : vector<16x128xf32> to vector<16x128xbf16>
    %c3_24 = arith.constant 3 : index
    %c0_25 = arith.constant 0 : index
    %c0_26 = arith.constant 0 : index
    %37 = vector.load %arg3[%c3_24, %c0_25, %c0_26] : memref<7x128x128xbf16, #tpu.memory_space<vmem>>, vector<1x128x128xbf16>
    %38 = vector.shape_cast %37 : vector<1x128x128xbf16> to vector<128x128xbf16>
    %cst_27 = arith.constant dense<0.000000e+00> : vector<16x128xf32>
    %39 = tpu.matmul %36, %38, %cst_27 {dimension_numbers = #tpu.dot_dimension_numbers<[1], [0], [0], [1], [0, 0, 1, 1], [], []>} : vector<16x128xbf16>, vector<128x128xbf16>, vector<16x128xf32> -> vector<16x128xf32>
    %c4 = arith.constant 4 : index
    %c0_28 = arith.constant 0 : index
    %40 = vector.load %arg5[%c4, %c0_28] : memref<8x128xf32, #tpu.memory_space<vmem>>, vector<1x128xf32>
    %41 = vector.broadcast %40 : vector<1x128xf32> to vector<16x128xf32>
    %42 = arith.addf %39, %41 : vector<16x128xf32>
    %cst_29 = arith.constant 0.000000e+00 : f32
    %43 = vector.broadcast %cst_29 : f32 to vector<16x128xf32>
    %44 = arith.maximumf %42, %43 : vector<16x128xf32>
    %45 = arith.truncf %44 : vector<16x128xf32> to vector<16x128xbf16>
    %c4_30 = arith.constant 4 : index
    %c0_31 = arith.constant 0 : index
    %c0_32 = arith.constant 0 : index
    %46 = vector.load %arg3[%c4_30, %c0_31, %c0_32] : memref<7x128x128xbf16, #tpu.memory_space<vmem>>, vector<1x128x128xbf16>
    %47 = vector.shape_cast %46 : vector<1x128x128xbf16> to vector<128x128xbf16>
    %cst_33 = arith.constant dense<0.000000e+00> : vector<16x128xf32>
    %48 = tpu.matmul %45, %47, %cst_33 {dimension_numbers = #tpu.dot_dimension_numbers<[1], [0], [0], [1], [0, 0, 1, 1], [], []>} : vector<16x128xbf16>, vector<128x128xbf16>, vector<16x128xf32> -> vector<16x128xf32>
    %c5 = arith.constant 5 : index
    %c0_34 = arith.constant 0 : index
    %49 = vector.load %arg5[%c5, %c0_34] : memref<8x128xf32, #tpu.memory_space<vmem>>, vector<1x128xf32>
    %50 = vector.broadcast %49 : vector<1x128xf32> to vector<16x128xf32>
    %51 = arith.addf %48, %50 : vector<16x128xf32>
    %cst_35 = arith.constant 0.000000e+00 : f32
    %52 = vector.broadcast %cst_35 : f32 to vector<16x128xf32>
    %53 = arith.maximumf %51, %52 : vector<16x128xf32>
    %54 = arith.truncf %53 : vector<16x128xf32> to vector<16x128xbf16>
    %c5_36 = arith.constant 5 : index
    %c0_37 = arith.constant 0 : index
    %c0_38 = arith.constant 0 : index
    %55 = vector.load %arg3[%c5_36, %c0_37, %c0_38] : memref<7x128x128xbf16, #tpu.memory_space<vmem>>, vector<1x128x128xbf16>
    %56 = vector.shape_cast %55 : vector<1x128x128xbf16> to vector<128x128xbf16>
    %cst_39 = arith.constant dense<0.000000e+00> : vector<16x128xf32>
    %57 = tpu.matmul %54, %56, %cst_39 {dimension_numbers = #tpu.dot_dimension_numbers<[1], [0], [0], [1], [0, 0, 1, 1], [], []>} : vector<16x128xbf16>, vector<128x128xbf16>, vector<16x128xf32> -> vector<16x128xf32>
    %c6 = arith.constant 6 : index
    %c0_40 = arith.constant 0 : index
    %58 = vector.load %arg5[%c6, %c0_40] : memref<8x128xf32, #tpu.memory_space<vmem>>, vector<1x128xf32>
    %59 = vector.broadcast %58 : vector<1x128xf32> to vector<16x128xf32>
    %60 = arith.addf %57, %59 : vector<16x128xf32>
    %cst_41 = arith.constant 0.000000e+00 : f32
    %61 = vector.broadcast %cst_41 : f32 to vector<16x128xf32>
    %62 = arith.maximumf %60, %61 : vector<16x128xf32>
    %63 = arith.truncf %62 : vector<16x128xf32> to vector<16x128xbf16>
    %c6_42 = arith.constant 6 : index
    %c0_43 = arith.constant 0 : index
    %c0_44 = arith.constant 0 : index
    %64 = vector.load %arg3[%c6_42, %c0_43, %c0_44] : memref<7x128x128xbf16, #tpu.memory_space<vmem>>, vector<1x128x128xbf16>
    %65 = vector.shape_cast %64 : vector<1x128x128xbf16> to vector<128x128xbf16>
    %cst_45 = arith.constant dense<0.000000e+00> : vector<16x128xf32>
    %66 = tpu.matmul %63, %65, %cst_45 {dimension_numbers = #tpu.dot_dimension_numbers<[1], [0], [0], [1], [0, 0, 1, 1], [], []>} : vector<16x128xbf16>, vector<128x128xbf16>, vector<16x128xf32> -> vector<16x128xf32>
    %c7 = arith.constant 7 : index
    %c0_46 = arith.constant 0 : index
    %67 = vector.load %arg5[%c7, %c0_46] : memref<8x128xf32, #tpu.memory_space<vmem>>, vector<1x128xf32>
    %68 = vector.broadcast %67 : vector<1x128xf32> to vector<16x128xf32>
    %69 = arith.addf %66, %68 : vector<16x128xf32>
    %cst_47 = arith.constant 0.000000e+00 : f32
    %70 = vector.broadcast %cst_47 : f32 to vector<16x128xf32>
    %71 = arith.maximumf %69, %70 : vector<16x128xf32>
    %72 = arith.truncf %71 : vector<16x128xf32> to vector<16x128xbf16>
    %c0_48 = arith.constant 0 : index
    %c0_49 = arith.constant 0 : index
    %73 = vector.load %arg4[%c0_48, %c0_49] : memref<128x16xbf16, #tpu.memory_space<vmem>>, vector<128x16xbf16>
    %cst_50 = arith.constant dense<0.000000e+00> : vector<16x16xf32>
    %74 = tpu.matmul %72, %73, %cst_50 {dimension_numbers = #tpu.dot_dimension_numbers<[1], [0], [0], [1], [0, 0, 1, 1], [], []>} : vector<16x128xbf16>, vector<128x16xbf16>, vector<16x16xf32> -> vector<16x16xf32>
    %c0_51 = arith.constant 0 : index
    %c0_52 = arith.constant 0 : index
    %75 = vector.load %arg6[%c0_51, %c0_52] : memref<1x16xf32, #tpu.memory_space<vmem>>, vector<1x16xf32>
    %76 = vector.broadcast %75 : vector<1x16xf32> to vector<16x16xf32>
    %77 = arith.addf %74, %76 : vector<16x16xf32>
    %c0_53 = arith.constant 0 : index
    %c0_54 = arith.constant 0 : index
    %78 = vector.load %arg7[%c0_53, %c0_54] : memref<16x16xf32, #tpu.memory_space<vmem>>, vector<16x16xf32>
    tpu.vector_store %arg7[%c0_53, %c0_54], %77 {strides = array<i32>} : memref<16x16xf32, #tpu.memory_space<vmem>>, vector<16x16xf32>,
    return
  }
  func.func @transform_0(%arg0: i32) -> (i32, i32) {
    %c0_i32 = arith.constant 0 : i32
    %c0_i32_0 = arith.constant 0 : i32
    return %arg0, %c0_i32 : i32, i32
  }
  func.func @transform_1(%arg0: i32) -> (i32, i32) {
    %c0_i32 = arith.constant 0 : i32
    %c0_i32_0 = arith.constant 0 : i32
    %c0_i32_1 = arith.constant 0 : i32
    return %c0_i32, %c0_i32_0 : i32, i32
  }
  func.func @transform_2(%arg0: i32) -> (i32, i32, i32) {
    %c0_i32 = arith.constant 0 : i32
    %c0_i32_0 = arith.constant 0 : i32
    %c0_i32_1 = arith.constant 0 : i32
    %c0_i32_2 = arith.constant 0 : i32
    return %c0_i32, %c0_i32_0, %c0_i32_1 : i32, i32, i32
  }
  func.func @transform_3(%arg0: i32) -> (i32, i32) {
    %c0_i32 = arith.constant 0 : i32
    %c0_i32_0 = arith.constant 0 : i32
    %c0_i32_1 = arith.constant 0 : i32
    return %c0_i32, %c0_i32_0 : i32, i32
  }
  func.func @transform_4(%arg0: i32) -> (i32, i32) {
    %c0_i32 = arith.constant 0 : i32
    %c0_i32_0 = arith.constant 0 : i32
    %c0_i32_1 = arith.constant 0 : i32
    return %c0_i32, %c0_i32_0 : i32, i32
  }
  func.func @transform_5(%arg0: i32) -> (i32, i32) {
    %c0_i32 = arith.constant 0 : i32
    %c0_i32_0 = arith.constant 0 : i32
    %c0_i32_1 = arith.constant 0 : i32
    return %c0_i32, %c0_i32_0 : i32, i32
  }
  func.func @transform_6(%arg0: i32) -> (i32, i32) {
    %c0_i32 = arith.constant 0 : i32
    %c0_i32_0 = arith.constant 0 : i32
    return %arg0, %c0_i32 : i32, i32
  }
}

</mosaic_0001>

<llo_original>
// kernel: tpu_custom_call.1
$region0: #{tpu_custom_call.1}
  #allocation0 [shape = 'u32[]', space=smem, size = 0x4, offset = 0x4, fixed_abs, tag = 'smem constant byte address 0x4 - core index']
  #allocation1 [shape = 'u32[72,128]{1,0:T(1,128)}', space=vmem, size = 0x9000, scoped, tag = 'internal scratch']
  %s0 = inlined_call_operand.hbm [shape: f32[16,784], index: 0, kind: input, shape index: {}]
  %s1 = inlined_call_operand.hbm [shape: bf16[784,128], index: 1, kind: input, shape index: {}]
  %s2 = inlined_call_operand.hbm [shape: bf16[7,128,128], index: 2, kind: input, shape index: {}]
  %s3 = inlined_call_operand.vmem [shape: bf16[128,16], index: 3, kind: input, shape index: {}]
  %s4 = inlined_call_operand.vmem [shape: f32[8,128], index: 4, kind: input, shape index: {}]
  %s5 = inlined_call_operand.vmem [shape: f32[1,16], index: 5, kind: input, shape index: {}]
  %s6 = inlined_call_operand.hbm [shape: f32[16,16], index: 6, kind: output, shape index: {}]
  %s7 = sld [smem:[#allocation0]]
  $region46: #{tpu_custom_call.1} parent=0
    _
  %s9 = ssub.s32 1, %s7
  %s10 = scalar_select 0, %s9, %s7
  $region1: #{tpu_custom_call.1} parent=0
    #allocation2 [shape = 'u8[57344]{0}', space=vmem, size = 0xe000, scoped, tag = 'input window, operand 0, single buffered']
    #allocation3 [shape = 's32[1]{0}', space=sflag, size = 0x4, scoped, tag = 'scoped memory for tpu_custom_call.1']
    #allocation4 [shape = 's32[1]{0}', space=sflag, size = 0x4, scoped, tag = 'scoped memory for tpu_custom_call.1']
    #allocation5 [shape = 'u8[200704]{0}', space=vmem, size = 0x31000, scoped, tag = 'input window, operand 1, single buffered']
    #allocation6 [shape = 's32[1]{0}', space=sflag, size = 0x4, scoped, tag = 'scoped memory for tpu_custom_call.1']
    #allocation7 [shape = 'u8[229376]{0}', space=vmem, size = 0x38000, scoped, tag = 'input window, operand 2, single buffered']
    #allocation8 [shape = 'u8[8192]{0}', space=vmem, size = 0x2000, scoped, tag = 'output window, operand 0, single buffered']
    %11 = vsyncpa [#allocation3], 0
    %12 = vsyncpa [#allocation6], 0
    %13 = vsyncpa [#allocation4], 0
    // Predicated region
    $region2: #{tpu_custom_call.1} parent=1 // pred_check
      _
    $region3: #{tpu_custom_call.1} parent=1 // pred_check_branch
      %15 = sbr.rel (0) target = $region5
    $region4: #{tpu_custom_call.1} parent=1 // pred_region
      %17 = vsyncadd [#allocation3], 0
      %s18 = sshll.u32 %s0, 4
      %s19 = int_to_ptr.hbm [resolvable:$true] %s18
      %s20 = sshll.u32 [#allocation2], 4
      %s21 = int_to_ptr.vmem [resolvable:$true] %s20
      %26 = dma.hbm_to_vmem [thread:$0]  %s19, 1792, %s21, [#allocation3], 896, 896, 56
    $region5: #{tpu_custom_call.1} parent=1 // pred_fallthru
      _
    // Predicated region
    $region6: #{tpu_custom_call.1} parent=1 // pred_check
      _
    $region7: #{tpu_custom_call.1} parent=1 // pred_check_branch
      %28 = sbr.rel (0) target = $region9
    $region8: #{tpu_custom_call.1} parent=1 // pred_region
      %30 = vsyncadd [#allocation6], 0
      %s31 = sshll.u32 %s1, 4
      %s32 = int_to_ptr.hbm [resolvable:$true] %s31
      %s33 = sshll.u32 [#allocation5], 4
      %s34 = int_to_ptr.vmem [resolvable:$true] %s33
      %39 = dma.hbm_to_vmem [thread:$0]  %s32, 6272, %s34, [#allocation6], 64, 64, 4
    $region9: #{tpu_custom_call.1} parent=1 // pred_fallthru
      _
    // Predicated region
    $region10: #{tpu_custom_call.1} parent=1 // pred_check
      _
    $region11: #{tpu_custom_call.1} parent=1 // pred_check_branch
      %41 = sbr.rel (0) target = $region13
    $region12: #{tpu_custom_call.1} parent=1 // pred_region
      %43 = vsyncadd [#allocation6], 0
      %s44 = sshll.u32 %s2, 4
      %s45 = int_to_ptr.hbm [resolvable:$true] %s44
      %s46 = sshll.u32 [#allocation7], 4
      %s47 = int_to_ptr.vmem [resolvable:$true] %s46
      %52 = dma.hbm_to_vmem [thread:$0]  %s45, 7168, %s47, [#allocation6], 64, 64, 4
    $region13: #{tpu_custom_call.1} parent=1 // pred_fallthru
      _
    // Predicated region
    $region14: #{tpu_custom_call.1} parent=1 // pred_check
      _
    $region15: #{tpu_custom_call.1} parent=1 // pred_check_branch
      %54 = sbr.rel (0) target = $region17
    $region16: #{tpu_custom_call.1} parent=1 // pred_region
      _
    $region17: #{tpu_custom_call.1} parent=1 // pred_fallthru
      _
    // Predicated region
    $region18: #{tpu_custom_call.1} parent=1 // pred_check
      _
    $region19: #{tpu_custom_call.1} parent=1 // pred_check_branch
      %56 = sbr.rel (0) target = $region21
    $region20: #{tpu_custom_call.1} parent=1 // pred_region
      _
    $region21: #{tpu_custom_call.1} parent=1 // pred_fallthru
      _
    // Predicated region
    $region22: #{tpu_custom_call.1} parent=1 // pred_check
      _
    $region23: #{tpu_custom_call.1} parent=1 // pred_check_branch
      %58 = sbr.rel (0) target = $region25
    $region24: #{tpu_custom_call.1} parent=1 // pred_region
      _
    $region25: #{tpu_custom_call.1} parent=1 // pred_fallthru
      _
    // Predicated region
    $region26: #{tpu_custom_call.1} parent=1 // pred_check
      _
    $region27: #{tpu_custom_call.1} parent=1 // pred_check_branch
      %60 = sbr.rel (0) target = $region29
    $region28: #{tpu_custom_call.1} parent=1 // pred_region
      %62 = dma.done [#allocation3], 1792
    $region29: #{tpu_custom_call.1} parent=1 // pred_fallthru
      _
    // Predicated region
    $region30: #{tpu_custom_call.1} parent=1 // pred_check
      _
    $region31: #{tpu_custom_call.1} parent=1 // pred_check_branch
      %64 = sbr.rel (0) target = $region33
    $region32: #{tpu_custom_call.1} parent=1 // pred_region
      %66 = dma.done [#allocation6], 6272
    $region33: #{tpu_custom_call.1} parent=1 // pred_fallthru
      _
    // Predicated region
    $region34: #{tpu_custom_call.1} parent=1 // pred_check
      _
    $region35: #{tpu_custom_call.1} parent=1 // pred_check_branch
      %68 = sbr.rel (0) target = $region37
    $region36: #{tpu_custom_call.1} parent=1 // pred_region
      %70 = dma.done [#allocation6], 7168
    $region37: #{tpu_custom_call.1} parent=1 // pred_fallthru
      _
    %v72 = vld [vmem:[#allocation2] sm:$0xff]
    %v73 = vld [vmem:[#allocation2 + $0x8] sm:$0xff]
    %v74 = vld [vmem:[#allocation2 + $0x10] sm:$0xff]
    %v75 = vld [vmem:[#allocation2 + $0x18] sm:$0xff]
    %v76 = vld [vmem:[#allocation2 + $0x20] sm:$0xff]
    %v77 = vld [vmem:[#allocation2 + $0x28] sm:$0xff]
    %v78 = vld [vmem:[#allocation2 + $0x30] sm:$0xff]
    %v79 = vld [vmem:[#allocation2 + $0x38] sm:$0xff]
    %v80 = vld [vmem:[#allocation2 + $0x40] sm:$0xff]
    %v81 = vld [vmem:[#allocation2 + $0x48] sm:$0xff]
    %v82 = vld [vmem:[#allocation2 + $0x50] sm:$0xff]
    %v83 = vld [vmem:[#allocation2 + $0x58] sm:$0xff]
    %v84 = vld [vmem:[#allocation2 + $0x60] sm:$0xff]
    %v85 = vld [vmem:[#allocation2 + $0x68] sm:$0xff]
    %v86 = vpack.c.bf16 %v79, %v72
    %v87 = vpack.c.bf16 %v80, %v73
    %v88 = vpack.c.bf16 %v81, %v74
    %v89 = vpack.c.bf16 %v82, %v75
    %v90 = vpack.c.bf16 %v83, %v76
    %v91 = vpack.c.bf16 %v84, %v77
    %v92 = vpack.c.bf16 %v85, %v78
    %v93 = vld [vmem:[#allocation5] sm:$0xf]
    %v94 = vld [vmem:[#allocation5 + $0x4] sm:$0xf]
    %v95 = vld [vmem:[#allocation5 + $0x8] sm:$0xf]
    %v96 = vld [vmem:[#allocation5 + $0xc] sm:$0xf]
    %v97 = vld [vmem:[#allocation5 + $0x10] sm:$0xf]
    %v98 = vld [vmem:[#allocation5 + $0x14] sm:$0xf]
    %v99 = vld [vmem:[#allocation5 + $0x18] sm:$0xf]
    %v100 = vld [vmem:[#allocation5 + $0x1c] sm:$0xf]
    %v101 = vld [vmem:[#allocation5 + $0x20] sm:$0xf]
    %v102 = vld [vmem:[#allocation5 + $0x24] sm:$0xf]
    %v103 = vld [vmem:[#allocation5 + $0x28] sm:$0xf]
    %v104 = vld [vmem:[#allocation5 + $0x2c] sm:$0xf]
    %v105 = vld [vmem:[#allocation5 + $0x30] sm:$0xf]
    %v106 = vld [vmem:[#allocation5 + $0x34] sm:$0xf]
    %v107 = vld [vmem:[#allocation5 + $0x38] sm:$0xf]
    %v108 = vld [vmem:[#allocation5 + $0x3c] sm:$0xf]
    %v109 = vld [vmem:[#allocation5 + $0x40] sm:$0xf]
    %v110 = vld [vmem:[#allocation5 + $0x44] sm:$0xf]
    %v111 = vld [vmem:[#allocation5 + $0x48] sm:$0xf]
    %v112 = vld [vmem:[#allocation5 + $0x4c] sm:$0xf]
    %v113 = vld [vmem:[#allocation5 + $0x50] sm:$0xf]
    %v114 = vld [vmem:[#allocation5 + $0x54] sm:$0xf]
    %v115 = vld [vmem:[#allocation5 + $0x58] sm:$0xf]
    %v116 = vld [vmem:[#allocation5 + $0x5c] sm:$0xf]
    %v117 = vld [vmem:[#allocation5 + $0x60] sm:$0xf]
    %v118 = vld [vmem:[#allocation5 + $0x64] sm:$0xf]
    %v119 = vld [vmem:[#allocation5 + $0x68] sm:$0xf]
    %v120 = vld [vmem:[#allocation5 + $0x6c] sm:$0xf]
    %v121 = vld [vmem:[#allocation5 + $0x70] sm:$0xf]
    %v122 = vld [vmem:[#allocation5 + $0x74] sm:$0xf]
    %v123 = vld [vmem:[#allocation5 + $0x78] sm:$0xf]
    %v124 = vld [vmem:[#allocation5 + $0x7c] sm:$0xf]
    %v125 = vld [vmem:[#allocation5 + $0x80] sm:$0xf]
    %v126 = vld [vmem:[#allocation5 + $0x84] sm:$0xf]
    %v127 = vld [vmem:[#allocation5 + $0x88] sm:$0xf]
    %v128 = vld [vmem:[#allocation5 + $0x8c] sm:$0xf]
    %v129 = vld [vmem:[#allocation5 + $0x90] sm:$0xf]
    %v130 = vld [vmem:[#allocation5 + $0x94] sm:$0xf]
    %v131 = vld [vmem:[#allocation5 + $0x98] sm:$0xf]
    %v132 = vld [vmem:[#allocation5 + $0x9c] sm:$0xf]
    %v133 = vld [vmem:[#allocation5 + $0xa0] sm:$0xf]
    %v134 = vld [vmem:[#allocation5 + $0xa4] sm:$0xf]
    %v135 = vld [vmem:[#allocation5 + $0xa8] sm:$0xf]
    %v136 = vld [vmem:[#allocation5 + $0xac] sm:$0xf]
    %v137 = vld [vmem:[#allocation5 + $0xb0] sm:$0xf]
    %v138 = vld [vmem:[#allocation5 + $0xb4] sm:$0xf]
    %v139 = vld [vmem:[#allocation5 + $0xb8] sm:$0xf]
    %v140 = vld [vmem:[#allocation5 + $0xbc] sm:$0xf]
    %v141 = vld [vmem:[#allocation5 + $0xc0] sm:$0xf]
    %v142 = vld [vmem:[#allocation5 + $0xc4] sm:$0xf]
    %v143 = vld [vmem:[#allocation5 + $0xc8] sm:$0xf]
    %v144 = vld [vmem:[#allocation5 + $0xcc] sm:$0xf]
    %v145 = vld [vmem:[#allocation5 + $0xd0] sm:$0xf]
    %v146 = vld [vmem:[#allocation5 + $0xd4] sm:$0xf]
    %v147 = vld [vmem:[#allocation5 + $0xd8] sm:$0xf]
    %v148 = vld [vmem:[#allocation5 + $0xdc] sm:$0xf]
    %v149 = vld [vmem:[#allocation5 + $0xe0] sm:$0xf]
    %v150 = vld [vmem:[#allocation5 + $0xe4] sm:$0xf]
    %v151 = vld [vmem:[#allocation5 + $0xe8] sm:$0xf]
    %v152 = vld [vmem:[#allocation5 + $0xec] sm:$0xf]
    %v153 = vld [vmem:[#allocation5 + $0xf0] sm:$0xf]
    %v154 = vld [vmem:[#allocation5 + $0xf4] sm:$0xf]
    %v155 = vld [vmem:[#allocation5 + $0xf8] sm:$0xf]
    %v156 = vld [vmem:[#allocation5 + $0xfc] sm:$0xf]
    %v157 = vld [vmem:[#allocation5 + $0x100] sm:$0xf]
    %v158 = vld [vmem:[#allocation5 + $0x104] sm:$0xf]
    %v159 = vld [vmem:[#allocation5 + $0x108] sm:$0xf]
    %v160 = vld [vmem:[#allocation5 + $0x10c] sm:$0xf]
    %v161 = vld [vmem:[#allocation5 + $0x110] sm:$0xf]
    %v162 = vld [vmem:[#allocation5 + $0x114] sm:$0xf]
    %v163 = vld [vmem:[#allocation5 + $0x118] sm:$0xf]
    %v164 = vld [vmem:[#allocation5 + $0x11c] sm:$0xf]
    %v165 = vld [vmem:[#allocation5 + $0x120] sm:$0xf]
    %v166 = vld [vmem:[#allocation5 + $0x124] sm:$0xf]
    %v167 = vld [vmem:[#allocation5 + $0x128] sm:$0xf]
    %v168 = vld [vmem:[#allocation5 + $0x12c] sm:$0xf]
    %v169 = vld [vmem:[#allocation5 + $0x130] sm:$0xf]
    %v170 = vld [vmem:[#allocation5 + $0x134] sm:$0xf]
    %v171 = vld [vmem:[#allocation5 + $0x138] sm:$0xf]
    %v172 = vld [vmem:[#allocation5 + $0x13c] sm:$0xf]
    %v173 = vld [vmem:[#allocation5 + $0x140] sm:$0xf]
    %v174 = vld [vmem:[#allocation5 + $0x144] sm:$0xf]
    %v175 = vld [vmem:[#allocation5 + $0x148] sm:$0xf]
    %v176 = vld [vmem:[#allocation5 + $0x14c] sm:$0xf]
    %v177 = vld [vmem:[#allocation5 + $0x150] sm:$0xf]
    %v178 = vld [vmem:[#allocation5 + $0x154] sm:$0xf]
    %v179 = vld [vmem:[#allocation5 + $0x158] sm:$0xf]
    %v180 = vld [vmem:[#allocation5 + $0x15c] sm:$0xf]
    %v181 = vld [vmem:[#allocation5 + $0x160] sm:$0xf]
    %v182 = vld [vmem:[#allocation5 + $0x164] sm:$0xf]
    %v183 = vld [vmem:[#allocation5 + $0x168] sm:$0xf]
    %v184 = vld [vmem:[#allocation5 + $0x16c] sm:$0xf]
    %v185 = vld [vmem:[#allocation5 + $0x170] sm:$0xf]
    %v186 = vld [vmem:[#allocation5 + $0x174] sm:$0xf]
    %v187 = vld [vmem:[#allocation5 + $0x178] sm:$0xf]
    %v188 = vld [vmem:[#allocation5 + $0x17c] sm:$0xf]
    %v189 = vld [vmem:[#allocation5 + $0x180] sm:$0xf]
    %v190 = vld [vmem:[#allocation5 + $0x184] sm:$0xf]
    %v191 = vld [vmem:[%s4] sm:$0x1]
    %v192 = vperm.slane %v191, 0
    %v291 = vunpack.c.l.b16 %v93
    %v292 = vunpack.c.l.b16 %v94
    %v293 = vunpack.c.l.b16 %v95
    %v294 = vunpack.c.l.b16 %v96
    %v295 = vunpack.c.l.b16 %v97
    %v296 = vunpack.c.l.b16 %v98
    %v297 = vunpack.c.l.b16 %v99
    %v298 = vunpack.c.l.b16 %v100
    %v299 = vunpack.c.l.b16 %v101
    %v300 = vunpack.c.l.b16 %v102
    %v301 = vunpack.c.l.b16 %v103
    %v302 = vunpack.c.l.b16 %v104
    %v303 = vunpack.c.l.b16 %v105
    %v304 = vunpack.c.l.b16 %v106
    %v305 = vunpack.c.l.b16 %v107
    %v306 = vunpack.c.l.b16 %v108
    %v307 = vunpack.c.l.b16 %v109
    %v308 = vunpack.c.l.b16 %v110
    %v309 = vunpack.c.l.b16 %v111
    %v310 = vunpack.c.l.b16 %v112
    %v311 = vunpack.c.l.b16 %v113
    %v312 = vunpack.c.l.b16 %v114
    %v313 = vunpack.c.l.b16 %v115
    %v314 = vunpack.c.l.b16 %v116
    %v315 = vunpack.c.l.b16 %v117
    %v316 = vunpack.c.l.b16 %v118
    %v317 = vunpack.c.l.b16 %v119
    %v318 = vunpack.c.l.b16 %v120
    %v319 = vunpack.c.l.b16 %v121
    %v320 = vunpack.c.l.b16 %v122
    %v321 = vunpack.c.l.b16 %v123
    %v322 = vunpack.c.l.b16 %v124
    %v323 = vunpack.c.l.b16 %v125
    %v324 = vunpack.c.l.b16 %v126
    %v325 = vunpack.c.l.b16 %v127
    %v326 = vunpack.c.l.b16 %v128
    %v327 = vunpack.c.l.b16 %v129
    %v328 = vunpack.c.l.b16 %v130
    %v329 = vunpack.c.l.b16 %v131
    %v330 = vunpack.c.l.b16 %v132
    %v331 = vunpack.c.l.b16 %v133
    %v332 = vunpack.c.l.b16 %v134
    %v333 = vunpack.c.l.b16 %v135
    %v334 = vunpack.c.l.b16 %v136
    %v335 = vunpack.c.l.b16 %v137
    %v336 = vunpack.c.l.b16 %v138
    %v337 = vunpack.c.l.b16 %v139
    %v338 = vunpack.c.l.b16 %v140
    %v339 = vunpack.c.l.b16 %v141
    %v340 = vunpack.c.l.b16 %v142
    %v341 = vunpack.c.l.b16 %v143
    %v342 = vunpack.c.l.b16 %v144
    %v343 = vunpack.c.l.b16 %v145
    %v344 = vunpack.c.l.b16 %v146
    %v345 = vunpack.c.l.b16 %v147
    %v346 = vunpack.c.l.b16 %v148
    %v347 = vunpack.c.l.b16 %v149
    %v348 = vunpack.c.l.b16 %v150
    %v349 = vunpack.c.l.b16 %v151
    %v350 = vunpack.c.l.b16 %v152
    %v351 = vunpack.c.l.b16 %v153
    %v352 = vunpack.c.l.b16 %v154
    %v353 = vunpack.c.l.b16 %v155
    %v354 = vunpack.c.l.b16 %v156
    %v355 = vunpack.c.l.b16 %v157
    %v356 = vunpack.c.l.b16 %v158
    %v357 = vunpack.c.l.b16 %v159
    %v358 = vunpack.c.l.b16 %v160
    %v359 = vunpack.c.l.b16 %v161
    %v360 = vunpack.c.l.b16 %v162
    %v361 = vunpack.c.l.b16 %v163
    %v362 = vunpack.c.l.b16 %v164
    %v363 = vunpack.c.l.b16 %v165
    %v364 = vunpack.c.l.b16 %v166
    %v365 = vunpack.c.l.b16 %v167
    %v366 = vunpack.c.l.b16 %v168
    %v367 = vunpack.c.l.b16 %v169
    %v368 = vunpack.c.l.b16 %v170
    %v369 = vunpack.c.l.b16 %v171
    %v370 = vunpack.c.l.b16 %v172
    %v371 = vunpack.c.l.b16 %v173
    %v372 = vunpack.c.l.b16 %v174
    %v373 = vunpack.c.l.b16 %v175
    %v374 = vunpack.c.l.b16 %v176
    %v375 = vunpack.c.l.b16 %v177
    %v376 = vunpack.c.l.b16 %v178
    %v377 = vunpack.c.l.b16 %v179
    %v378 = vunpack.c.l.b16 %v180
    %v379 = vunpack.c.l.b16 %v181
    %v380 = vunpack.c.l.b16 %v182
    %v381 = vunpack.c.l.b16 %v183
    %v382 = vunpack.c.l.b16 %v184
    %v383 = vunpack.c.l.b16 %v185
    %v384 = vunpack.c.l.b16 %v186
    %v385 = vunpack.c.l.b16 %v187
    %v386 = vunpack.c.l.b16 %v188
    %v387 = vunpack.c.l.b16 %v189
    %v388 = vunpack.c.l.b16 %v190
    %v389 = vpack.c.b16 %v292, %v291
    %v390 = vpack.c.b16 %v294, %v293
    %v391 = vpack.c.b16 %v296, %v295
    %v392 = vpack.c.b16 %v298, %v297
    %v393 = vpack.c.b16 %v300, %v299
    %v394 = vpack.c.b16 %v302, %v301
    %v395 = vpack.c.b16 %v304, %v303
    %v396 = vpack.c.b16 %v306, %v305
    %v397 = vpack.c.b16 %v308, %v307
    %v398 = vpack.c.b16 %v310, %v309
    %v399 = vpack.c.b16 %v312, %v311
    %v400 = vpack.c.b16 %v314, %v313
    %v401 = vpack.c.b16 %v316, %v315
    %v402 = vpack.c.b16 %v318, %v317
    %v403 = vpack.c.b16 %v320, %v319
    %v404 = vpack.c.b16 %v322, %v321
    %v405 = vpack.c.b16 %v324, %v323
    %v406 = vpack.c.b16 %v326, %v325
    %v407 = vpack.c.b16 %v328, %v327
    %v408 = vpack.c.b16 %v330, %v329
    %v409 = vpack.c.b16 %v332, %v331
    %v410 = vpack.c.b16 %v334, %v333
    %v411 = vpack.c.b16 %v336, %v335
    %v412 = vpack.c.b16 %v338, %v337
    %v413 = vpack.c.b16 %v340, %v339
    %v414 = vpack.c.b16 %v342, %v341
    %v415 = vpack.c.b16 %v344, %v343
    %v416 = vpack.c.b16 %v346, %v345
    %v417 = vpack.c.b16 %v348, %v347
    %v418 = vpack.c.b16 %v350, %v349
    %v419 = vpack.c.b16 %v352, %v351
    %v420 = vpack.c.b16 %v354, %v353
    %v421 = vpack.c.b16 %v356, %v355
    %v422 = vpack.c.b16 %v358, %v357
    %v423 = vpack.c.b16 %v360, %v359
    %v424 = vpack.c.b16 %v362, %v361
    %v425 = vpack.c.b16 %v364, %v363
    %v426 = vpack.c.b16 %v366, %v365
    %v427 = vpack.c.b16 %v368, %v367
    %v428 = vpack.c.b16 %v370, %v369
    %v429 = vpack.c.b16 %v372, %v371
    %v430 = vpack.c.b16 %v374, %v373
    %v431 = vpack.c.b16 %v376, %v375
    %v432 = vpack.c.b16 %v378, %v377
    %v433 = vpack.c.b16 %v380, %v379
    %v434 = vpack.c.b16 %v382, %v381
    %v435 = vpack.c.b16 %v384, %v383
    %v436 = vpack.c.b16 %v386, %v385
    %v437 = vpack.c.b16 %v388, %v387
    %vm487 = vcmask 130048
    %v489 = vsel %vm487, %v92, 0
    %491 = vmatpush.bf16.msra.mxu0 %v396
    %492 = vmatpush.bf16.msra.mxu0 %v395
    %493 = vmatpush.bf16.msra.mxu0 %v394
    %494 = vmatpush.bf16.msra.mxu0 %v393
    %495 = vmatpush.bf16.msra.mxu0 %v392
    %496 = vmatpush.bf16.msra.mxu0 %v391
    %497 = vmatpush.bf16.msra.mxu0 %v390
    %498 = vmatpush.bf16.msra.mxu0 %v389
    %499 = vmatmul.bf16.gmra.mxu0 %v86
    %v500 = vpop.f32.mrf.mxu0
    %v501 = vadd.f32 %v192, %v500
    %v502 = vpop.f32.mrf.mxu0
    %v503 = vadd.f32 %v192, %v502
    %504 = vdwg.mxu0
    %505 = vmatpush.bf16.msra.mxu0 %v404
    %506 = vmatpush.bf16.msra.mxu0 %v403
    %507 = vmatpush.bf16.msra.mxu0 %v402
    %508 = vmatpush.bf16.msra.mxu0 %v401
    %509 = vmatpush.bf16.msra.mxu0 %v400
    %510 = vmatpush.bf16.msra.mxu0 %v399
    %511 = vmatpush.bf16.msra.mxu0 %v398
    %512 = vmatpush.bf16.msra.mxu0 %v397
    %513 = vmatmul.bf16.gmra.mxu0 %v87
    %v514 = vpop.f32.mrf.mxu0
    %v515 = vadd.f32 %v501, %v514
    %v516 = vpop.f32.mrf.mxu0
    %v517 = vadd.f32 %v503, %v516
    %518 = vdwg.mxu0
    %519 = vmatpush.bf16.msra.mxu0 %v412
    %520 = vmatpush.bf16.msra.mxu0 %v411
    %521 = vmatpush.bf16.msra.mxu0 %v410
    %522 = vmatpush.bf16.msra.mxu0 %v409
    %523 = vmatpush.bf16.msra.mxu0 %v408
    %524 = vmatpush.bf16.msra.mxu0 %v407
    %525 = vmatpush.bf16.msra.mxu0 %v406
    %526 = vmatpush.bf16.msra.mxu0 %v405
    %527 = vmatmul.bf16.gmra.mxu0 %v88
    %v528 = vpop.f32.mrf.mxu0
    %v529 = vadd.f32 %v515, %v528
    %v530 = vpop.f32.mrf.mxu0
    %v531 = vadd.f32 %v517, %v530
    %532 = vdwg.mxu0
    %533 = vmatpush.bf16.msra.mxu0 %v420
    %534 = vmatpush.bf16.msra.mxu0 %v419
    %535 = vmatpush.bf16.msra.mxu0 %v418
    %536 = vmatpush.bf16.msra.mxu0 %v417
    %537 = vmatpush.bf16.msra.mxu0 %v416
    %538 = vmatpush.bf16.msra.mxu0 %v415
    %539 = vmatpush.bf16.msra.mxu0 %v414
    %540 = vmatpush.bf16.msra.mxu0 %v413
    %541 = vmatmul.bf16.gmra.mxu0 %v89
    %v542 = vpop.f32.mrf.mxu0
    %v543 = vadd.f32 %v529, %v542
    %v544 = vpop.f32.mrf.mxu0
    %v545 = vadd.f32 %v531, %v544
    %546 = vdwg.mxu0
    %547 = vmatpush.bf16.msra.mxu0 %v428
    %548 = vmatpush.bf16.msra.mxu0 %v427
    %549 = vmatpush.bf16.msra.mxu0 %v426
    %550 = vmatpush.bf16.msra.mxu0 %v425
    %551 = vmatpush.bf16.msra.mxu0 %v424
    %552 = vmatpush.bf16.msra.mxu0 %v423
    %553 = vmatpush.bf16.msra.mxu0 %v422
    %554 = vmatpush.bf16.msra.mxu0 %v421
    %555 = vmatmul.bf16.gmra.mxu0 %v90
    %v556 = vpop.f32.mrf.mxu0
    %v557 = vadd.f32 %v543, %v556
    %v558 = vpop.f32.mrf.mxu0
    %v559 = vadd.f32 %v545, %v558
    %560 = vdwg.mxu0
    %561 = vmatpush.bf16.msra.mxu0 %v436
    %562 = vmatpush.bf16.msra.mxu0 %v435
    %563 = vmatpush.bf16.msra.mxu0 %v434
    %564 = vmatpush.bf16.msra.mxu0 %v433
    %565 = vmatpush.bf16.msra.mxu0 %v432
    %566 = vmatpush.bf16.msra.mxu0 %v431
    %567 = vmatpush.bf16.msra.mxu0 %v430
    %568 = vmatpush.bf16.msra.mxu0 %v429
    %569 = vmatmul.bf16.gmra.mxu0 %v91
    %v570 = vpop.f32.mrf.mxu0
    %v571 = vadd.f32 %v557, %v570
    %v572 = vpop.f32.mrf.mxu0
    %v573 = vadd.f32 %v559, %v572
    %574 = vdwg.mxu0
    %575 = vmatpush.bf16.msra.mxu0 0
    %576 = vmatpush.bf16.msra.mxu0 0
    %577 = vmatpush.bf16.msra.mxu0 0
    %578 = vmatpush.bf16.msra.mxu0 0
    %579 = vmatpush.bf16.msra.mxu0 0
    %580 = vmatpush.bf16.msra.mxu0 0
    %581 = vmatpush.bf16.msra.mxu0 0
    %582 = vmatpush.bf16.msra.mxu0 %v437
    %583 = vmatmul.bf16.gmra.mxu0 %v489
    %v584 = vpop.f32.mrf.mxu0
    %v585 = vadd.f32 %v571, %v584
    %v586 = vpop.f32.mrf.mxu0
    %v587 = vadd.f32 %v573, %v586
    %588 = vdwg.mxu0
    %v589 = vmax.f32 %v585, 0.0
    %v590 = vmax.f32 %v587, 0.0
    %v591 = vpack.c.bf16 %v590, %v589
    %v592 = vld [vmem:[#allocation7] sm:$0xf]
    %v593 = vld [vmem:[#allocation7 + $0x4] sm:$0xf]
    %v594 = vld [vmem:[#allocation7 + $0x8] sm:$0xf]
    %v595 = vld [vmem:[#allocation7 + $0xc] sm:$0xf]
    %v596 = vld [vmem:[#allocation7 + $0x10] sm:$0xf]
    %v597 = vld [vmem:[#allocation7 + $0x14] sm:$0xf]
    %v598 = vld [vmem:[#allocation7 + $0x18] sm:$0xf]
    %v599 = vld [vmem:[#allocation7 + $0x1c] sm:$0xf]
    %v600 = vld [vmem:[#allocation7 + $0x20] sm:$0xf]
    %v601 = vld [vmem:[#allocation7 + $0x24] sm:$0xf]
    %v602 = vld [vmem:[#allocation7 + $0x28] sm:$0xf]
    %v603 = vld [vmem:[#allocation7 + $0x2c] sm:$0xf]
    %v604 = vld [vmem:[#allocation7 + $0x30] sm:$0xf]
    %v605 = vld [vmem:[#allocation7 + $0x34] sm:$0xf]
    %v606 = vld [vmem:[#allocation7 + $0x38] sm:$0xf]
    %v607 = vld [vmem:[#allocation7 + $0x3c] sm:$0xf]
    %v608 = vld [vmem:[%s4 + $0x1] sm:$0x1]
    %v609 = vperm.slane %v608, 0
    %v626 = vunpack.c.l.b16 %v592
    %v627 = vunpack.c.l.b16 %v593
    %v628 = vunpack.c.l.b16 %v594
    %v629 = vunpack.c.l.b16 %v595
    %v630 = vunpack.c.l.b16 %v596
    %v631 = vunpack.c.l.b16 %v597
    %v632 = vunpack.c.l.b16 %v598
    %v633 = vunpack.c.l.b16 %v599
    %v634 = vunpack.c.l.b16 %v600
    %v635 = vunpack.c.l.b16 %v601
    %v636 = vunpack.c.l.b16 %v602
    %v637 = vunpack.c.l.b16 %v603
    %v638 = vunpack.c.l.b16 %v604
    %v639 = vunpack.c.l.b16 %v605
    %v640 = vunpack.c.l.b16 %v606
    %v641 = vunpack.c.l.b16 %v607
    %v642 = vpack.c.b16 %v627, %v626
    %v643 = vpack.c.b16 %v629, %v628
    %v644 = vpack.c.b16 %v631, %v630
    %v645 = vpack.c.b16 %v633, %v632
    %v646 = vpack.c.b16 %v635, %v634
    %v647 = vpack.c.b16 %v637, %v636
    %v648 = vpack.c.b16 %v639, %v638
    %v649 = vpack.c.b16 %v641, %v640
    %658 = vmatpush.bf16.msra.mxu0 %v649
    %659 = vmatpush.bf16.msra.mxu0 %v648
    %660 = vmatpush.bf16.msra.mxu0 %v647
    %661 = vmatpush.bf16.msra.mxu0 %v646
    %662 = vmatpush.bf16.msra.mxu0 %v645
    %663 = vmatpush.bf16.msra.mxu0 %v644
    %664 = vmatpush.bf16.msra.mxu0 %v643
    %665 = vmatpush.bf16.msra.mxu0 %v642
    %666 = vmatmul.bf16.gmra.mxu0 %v591
    %v667 = vpop.f32.mrf.mxu0
    %v668 = vadd.f32 %v609, %v667
    %v669 = vpop.f32.mrf.mxu0
    %v670 = vadd.f32 %v609, %v669
    %671 = vdwg.mxu0
    %v672 = vmax.f32 %v668, 0.0
    %v673 = vmax.f32 %v670, 0.0
    %v674 = vpack.c.bf16 %v673, %v672
    %s675 = scalar_lea.vmem [#allocation7], 64
    %v676 = vld [vmem:[%s675] sm:$0xf]
    %v677 = vld [vmem:[%s675 + $0x4] sm:$0xf]
    %v678 = vld [vmem:[%s675 + $0x8] sm:$0xf]
    %v679 = vld [vmem:[%s675 + $0xc] sm:$0xf]
    %v680 = vld [vmem:[%s675 + $0x10] sm:$0xf]
    %v681 = vld [vmem:[%s675 + $0x14] sm:$0xf]
    %v682 = vld [vmem:[%s675 + $0x18] sm:$0xf]
    %v683 = vld [vmem:[%s675 + $0x1c] sm:$0xf]
    %v684 = vld [vmem:[%s675 + $0x20] sm:$0xf]
    %v685 = vld [vmem:[%s675 + $0x24] sm:$0xf]
    %v686 = vld [vmem:[%s675 + $0x28] sm:$0xf]
    %v687 = vld [vmem:[%s675 + $0x2c] sm:$0xf]
    %v688 = vld [vmem:[%s675 + $0x30] sm:$0xf]
    %v689 = vld [vmem:[%s675 + $0x34] sm:$0xf]
    %v690 = vld [vmem:[%s675 + $0x38] sm:$0xf]
    %v691 = vld [vmem:[%s675 + $0x3c] sm:$0xf]
    %v692 = vld [vmem:[%s4 + $0x2] sm:$0x1]
    %v693 = vperm.slane %v692, 0
    %v710 = vunpack.c.l.b16 %v676
    %v711 = vunpack.c.l.b16 %v677
    %v712 = vunpack.c.l.b16 %v678
    %v713 = vunpack.c.l.b16 %v679
    %v714 = vunpack.c.l.b16 %v680
    %v715 = vunpack.c.l.b16 %v681
    %v716 = vunpack.c.l.b16 %v682
    %v717 = vunpack.c.l.b16 %v683
    %v718 = vunpack.c.l.b16 %v684
    %v719 = vunpack.c.l.b16 %v685
    %v720 = vunpack.c.l.b16 %v686
    %v721 = vunpack.c.l.b16 %v687
    %v722 = vunpack.c.l.b16 %v688
    %v723 = vunpack.c.l.b16 %v689
    %v724 = vunpack.c.l.b16 %v690
    %v725 = vunpack.c.l.b16 %v691
    %v726 = vpack.c.b16 %v711, %v710
    %v727 = vpack.c.b16 %v713, %v712
    %v728 = vpack.c.b16 %v715, %v714
    %v729 = vpack.c.b16 %v717, %v716
    %v730 = vpack.c.b16 %v719, %v718
    %v731 = vpack.c.b16 %v721, %v720
    %v732 = vpack.c.b16 %v723, %v722
    %v733 = vpack.c.b16 %v725, %v724
    %742 = vmatpush.bf16.msra.mxu0 %v733
    %743 = vmatpush.bf16.msra.mxu0 %v732
    %744 = vmatpush.bf16.msra.mxu0 %v731
    %745 = vmatpush.bf16.msra.mxu0 %v730
    %746 = vmatpush.bf16.msra.mxu0 %v729
    %747 = vmatpush.bf16.msra.mxu0 %v728
    %748 = vmatpush.bf16.msra.mxu0 %v727
    %749 = vmatpush.bf16.msra.mxu0 %v726
    %750 = vmatmul.bf16.gmra.mxu0 %v674
    %v751 = vpop.f32.mrf.mxu0
    %v752 = vadd.f32 %v693, %v751
    %v753 = vpop.f32.mrf.mxu0
    %v754 = vadd.f32 %v693, %v753
    %755 = vdwg.mxu0
    %v756 = vmax.f32 %v752, 0.0
    %v757 = vmax.f32 %v754, 0.0
    %v758 = vpack.c.bf16 %v757, %v756
    %s759 = scalar_lea.vmem [#allocation7], 128
    %v760 = vld [vmem:[%s759] sm:$0xf]
    %v761 = vld [vmem:[%s759 + $0x4] sm:$0xf]
    %v762 = vld [vmem:[%s759 + $0x8] sm:$0xf]
    %v763 = vld [vmem:[%s759 + $0xc] sm:$0xf]
    %v764 = vld [vmem:[%s759 + $0x10] sm:$0xf]
    %v765 = vld [vmem:[%s759 + $0x14] sm:$0xf]
    %v766 = vld [vmem:[%s759 + $0x18] sm:$0xf]
    %v767 = vld [vmem:[%s759 + $0x1c] sm:$0xf]
    %v768 = vld [vmem:[%s759 + $0x20] sm:$0xf]
    %v769 = vld [vmem:[%s759 + $0x24] sm:$0xf]
    %v770 = vld [vmem:[%s759 + $0x28] sm:$0xf]
    %v771 = vld [vmem:[%s759 + $0x2c] sm:$0xf]
    %v772 = vld [vmem:[%s759 + $0x30] sm:$0xf]
    %v773 = vld [vmem:[%s759 + $0x34] sm:$0xf]
    %v774 = vld [vmem:[%s759 + $0x38] sm:$0xf]
    %v775 = vld [vmem:[%s759 + $0x3c] sm:$0xf]
    %v776 = vld [vmem:[%s4 + $0x3] sm:$0x1]
    %v777 = vperm.slane %v776, 0
    %v794 = vunpack.c.l.b16 %v760
    %v795 = vunpack.c.l.b16 %v761
    %v796 = vunpack.c.l.b16 %v762
    %v797 = vunpack.c.l.b16 %v763
    %v798 = vunpack.c.l.b16 %v764
    %v799 = vunpack.c.l.b16 %v765
    %v800 = vunpack.c.l.b16 %v766
    %v801 = vunpack.c.l.b16 %v767
    %v802 = vunpack.c.l.b16 %v768
    %v803 = vunpack.c.l.b16 %v769
    %v804 = vunpack.c.l.b16 %v770
    %v805 = vunpack.c.l.b16 %v771
    %v806 = vunpack.c.l.b16 %v772
    %v807 = vunpack.c.l.b16 %v773
    %v808 = vunpack.c.l.b16 %v774
    %v809 = vunpack.c.l.b16 %v775
    %v810 = vpack.c.b16 %v795, %v794
    %v811 = vpack.c.b16 %v797, %v796
    %v812 = vpack.c.b16 %v799, %v798
    %v813 = vpack.c.b16 %v801, %v800
    %v814 = vpack.c.b16 %v803, %v802
    %v815 = vpack.c.b16 %v805, %v804
    %v816 = vpack.c.b16 %v807, %v806
    %v817 = vpack.c.b16 %v809, %v808
    %826 = vmatpush.bf16.msra.mxu0 %v817
    %827 = vmatpush.bf16.msra.mxu0 %v816
    %828 = vmatpush.bf16.msra.mxu0 %v815
    %829 = vmatpush.bf16.msra.mxu0 %v814
    %830 = vmatpush.bf16.msra.mxu0 %v813
    %831 = vmatpush.bf16.msra.mxu0 %v812
    %832 = vmatpush.bf16.msra.mxu0 %v811
    %833 = vmatpush.bf16.msra.mxu0 %v810
    %834 = vmatmul.bf16.gmra.mxu0 %v758
    %v835 = vpop.f32.mrf.mxu0
    %v836 = vadd.f32 %v777, %v835
    %v837 = vpop.f32.mrf.mxu0
    %v838 = vadd.f32 %v777, %v837
    %839 = vdwg.mxu0
    %v840 = vmax.f32 %v836, 0.0
    %v841 = vmax.f32 %v838, 0.0
    %v842 = vpack.c.bf16 %v841, %v840
    %s843 = scalar_lea.vmem [#allocation7], 192
    %v844 = vld [vmem:[%s843] sm:$0xf]
    %v845 = vld [vmem:[%s843 + $0x4] sm:$0xf]
    %v846 = vld [vmem:[%s843 + $0x8] sm:$0xf]
    %v847 = vld [vmem:[%s843 + $0xc] sm:$0xf]
    %v848 = vld [vmem:[%s843 + $0x10] sm:$0xf]
    %v849 = vld [vmem:[%s843 + $0x14] sm:$0xf]
    %v850 = vld [vmem:[%s843 + $0x18] sm:$0xf]
    %v851 = vld [vmem:[%s843 + $0x1c] sm:$0xf]
    %v852 = vld [vmem:[%s843 + $0x20] sm:$0xf]
    %v853 = vld [vmem:[%s843 + $0x24] sm:$0xf]
    %v854 = vld [vmem:[%s843 + $0x28] sm:$0xf]
    %v855 = vld [vmem:[%s843 + $0x2c] sm:$0xf]
    %v856 = vld [vmem:[%s843 + $0x30] sm:$0xf]
    %v857 = vld [vmem:[%s843 + $0x34] sm:$0xf]
    %v858 = vld [vmem:[%s843 + $0x38] sm:$0xf]
    %v859 = vld [vmem:[%s843 + $0x3c] sm:$0xf]
    %v860 = vld [vmem:[%s4 + $0x4] sm:$0x1]
    %v861 = vperm.slane %v860, 0
    %v878 = vunpack.c.l.b16 %v844
    %v879 = vunpack.c.l.b16 %v845
    %v880 = vunpack.c.l.b16 %v846
    %v881 = vunpack.c.l.b16 %v847
    %v882 = vunpack.c.l.b16 %v848
    %v883 = vunpack.c.l.b16 %v849
    %v884 = vunpack.c.l.b16 %v850
    %v885 = vunpack.c.l.b16 %v851
    %v886 = vunpack.c.l.b16 %v852
    %v887 = vunpack.c.l.b16 %v853
    %v888 = vunpack.c.l.b16 %v854
    %v889 = vunpack.c.l.b16 %v855
    %v890 = vunpack.c.l.b16 %v856
    %v891 = vunpack.c.l.b16 %v857
    %v892 = vunpack.c.l.b16 %v858
    %v893 = vunpack.c.l.b16 %v859
    %v894 = vpack.c.b16 %v879, %v878
    %v895 = vpack.c.b16 %v881, %v880
    %v896 = vpack.c.b16 %v883, %v882
    %v897 = vpack.c.b16 %v885, %v884
    %v898 = vpack.c.b16 %v887, %v886
    %v899 = vpack.c.b16 %v889, %v888
    %v900 = vpack.c.b16 %v891, %v890
    %v901 = vpack.c.b16 %v893, %v892
    %910 = vmatpush.bf16.msra.mxu0 %v901
    %911 = vmatpush.bf16.msra.mxu0 %v900
    %912 = vmatpush.bf16.msra.mxu0 %v899
    %913 = vmatpush.bf16.msra.mxu0 %v898
    %914 = vmatpush.bf16.msra.mxu0 %v897
    %915 = vmatpush.bf16.msra.mxu0 %v896
    %916 = vmatpush.bf16.msra.mxu0 %v895
    %917 = vmatpush.bf16.msra.mxu0 %v894
    %918 = vmatmul.bf16.gmra.mxu0 %v842
    %v919 = vpop.f32.mrf.mxu0
    %v920 = vadd.f32 %v861, %v919
    %v921 = vpop.f32.mrf.mxu0
    %v922 = vadd.f32 %v861, %v921
    %923 = vdwg.mxu0
    %v924 = vmax.f32 %v920, 0.0
    %v925 = vmax.f32 %v922, 0.0
    %v926 = vpack.c.bf16 %v925, %v924
    %s927 = scalar_lea.vmem [#allocation7], 256
    %v928 = vld [vmem:[%s927] sm:$0xf]
    %v929 = vld [vmem:[%s927 + $0x4] sm:$0xf]
    %v930 = vld [vmem:[%s927 + $0x8] sm:$0xf]
    %v931 = vld [vmem:[%s927 + $0xc] sm:$0xf]
    %v932 = vld [vmem:[%s927 + $0x10] sm:$0xf]
    %v933 = vld [vmem:[%s927 + $0x14] sm:$0xf]
    %v934 = vld [vmem:[%s927 + $0x18] sm:$0xf]
    %v935 = vld [vmem:[%s927 + $0x1c] sm:$0xf]
    %v936 = vld [vmem:[%s927 + $0x20] sm:$0xf]
    %v937 = vld [vmem:[%s927 + $0x24] sm:$0xf]
    %v938 = vld [vmem:[%s927 + $0x28] sm:$0xf]
    %v939 = vld [vmem:[%s927 + $0x2c] sm:$0xf]
    %v940 = vld [vmem:[%s927 + $0x30] sm:$0xf]
    %v941 = vld [vmem:[%s927 + $0x34] sm:$0xf]
    %v942 = vld [vmem:[%s927 + $0x38] sm:$0xf]
    %v943 = vld [vmem:[%s927 + $0x3c] sm:$0xf]
    %v944 = vld [vmem:[%s4 + $0x5] sm:$0x1]
    %v945 = vperm.slane %v944, 0
    %v962 = vunpack.c.l.b16 %v928
    %v963 = vunpack.c.l.b16 %v929
    %v964 = vunpack.c.l.b16 %v930
    %v965 = vunpack.c.l.b16 %v931
    %v966 = vunpack.c.l.b16 %v932
    %v967 = vunpack.c.l.b16 %v933
    %v968 = vunpack.c.l.b16 %v934
    %v969 = vunpack.c.l.b16 %v935
    %v970 = vunpack.c.l.b16 %v936
    %v971 = vunpack.c.l.b16 %v937
    %v972 = vunpack.c.l.b16 %v938
    %v973 = vunpack.c.l.b16 %v939
    %v974 = vunpack.c.l.b16 %v940
    %v975 = vunpack.c.l.b16 %v941
    %v976 = vunpack.c.l.b16 %v942
    %v977 = vunpack.c.l.b16 %v943
    %v978 = vpack.c.b16 %v963, %v962
    %v979 = vpack.c.b16 %v965, %v964
    %v980 = vpack.c.b16 %v967, %v966
    %v981 = vpack.c.b16 %v969, %v968
    %v982 = vpack.c.b16 %v971, %v970
    %v983 = vpack.c.b16 %v973, %v972
    %v984 = vpack.c.b16 %v975, %v974
    %v985 = vpack.c.b16 %v977, %v976
    %994 = vmatpush.bf16.msra.mxu0 %v985
    %995 = vmatpush.bf16.msra.mxu0 %v984
    %996 = vmatpush.bf16.msra.mxu0 %v983
    %997 = vmatpush.bf16.msra.mxu0 %v982
    %998 = vmatpush.bf16.msra.mxu0 %v981
    %999 = vmatpush.bf16.msra.mxu0 %v980
    %1000 = vmatpush.bf16.msra.mxu0 %v979
    %1001 = vmatpush.bf16.msra.mxu0 %v978
    %1002 = vmatmul.bf16.gmra.mxu0 %v926
    %v1003 = vpop.f32.mrf.mxu0
    %v1004 = vadd.f32 %v945, %v1003
    %v1005 = vpop.f32.mrf.mxu0
    %v1006 = vadd.f32 %v945, %v1005
    %1007 = vdwg.mxu0
    %v1008 = vmax.f32 %v1004, 0.0
    %v1009 = vmax.f32 %v1006, 0.0
    %v1010 = vpack.c.bf16 %v1009, %v1008
    %s1011 = scalar_lea.vmem [#allocation7], 320
    %v1012 = vld [vmem:[%s1011] sm:$0xf]
    %v1013 = vld [vmem:[%s1011 + $0x4] sm:$0xf]
    %v1014 = vld [vmem:[%s1011 + $0x8] sm:$0xf]
    %v1015 = vld [vmem:[%s1011 + $0xc] sm:$0xf]
    %v1016 = vld [vmem:[%s1011 + $0x10] sm:$0xf]
    %v1017 = vld [vmem:[%s1011 + $0x14] sm:$0xf]
    %v1018 = vld [vmem:[%s1011 + $0x18] sm:$0xf]
    %v1019 = vld [vmem:[%s1011 + $0x1c] sm:$0xf]
    %v1020 = vld [vmem:[%s1011 + $0x20] sm:$0xf]
    %v1021 = vld [vmem:[%s1011 + $0x24] sm:$0xf]
    %v1022 = vld [vmem:[%s1011 + $0x28] sm:$0xf]
    %v1023 = vld [vmem:[%s1011 + $0x2c] sm:$0xf]
    %v1024 = vld [vmem:[%s1011 + $0x30] sm:$0xf]
    %v1025 = vld [vmem:[%s1011 + $0x34] sm:$0xf]
    %v1026 = vld [vmem:[%s1011 + $0x38] sm:$0xf]
    %v1027 = vld [vmem:[%s1011 + $0x3c] sm:$0xf]
    %v1028 = vld [vmem:[%s4 + $0x6] sm:$0x1]
    %v1029 = vperm.slane %v1028, 0
    %v1046 = vunpack.c.l.b16 %v1012
    %v1047 = vunpack.c.l.b16 %v1013
    %v1048 = vunpack.c.l.b16 %v1014
    %v1049 = vunpack.c.l.b16 %v1015
    %v1050 = vunpack.c.l.b16 %v1016
    %v1051 = vunpack.c.l.b16 %v1017
    %v1052 = vunpack.c.l.b16 %v1018
    %v1053 = vunpack.c.l.b16 %v1019
    %v1054 = vunpack.c.l.b16 %v1020
    %v1055 = vunpack.c.l.b16 %v1021
    %v1056 = vunpack.c.l.b16 %v1022
    %v1057 = vunpack.c.l.b16 %v1023
    %v1058 = vunpack.c.l.b16 %v1024
    %v1059 = vunpack.c.l.b16 %v1025
    %v1060 = vunpack.c.l.b16 %v1026
    %v1061 = vunpack.c.l.b16 %v1027
    %v1062 = vpack.c.b16 %v1047, %v1046
    %v1063 = vpack.c.b16 %v1049, %v1048
    %v1064 = vpack.c.b16 %v1051, %v1050
    %v1065 = vpack.c.b16 %v1053, %v1052
    %v1066 = vpack.c.b16 %v1055, %v1054
    %v1067 = vpack.c.b16 %v1057, %v1056
    %v1068 = vpack.c.b16 %v1059, %v1058
    %v1069 = vpack.c.b16 %v1061, %v1060
    %1078 = vmatpush.bf16.msra.mxu0 %v1069
    %1079 = vmatpush.bf16.msra.mxu0 %v1068
    %1080 = vmatpush.bf16.msra.mxu0 %v1067
    %1081 = vmatpush.bf16.msra.mxu0 %v1066
    %1082 = vmatpush.bf16.msra.mxu0 %v1065
    %1083 = vmatpush.bf16.msra.mxu0 %v1064
    %1084 = vmatpush.bf16.msra.mxu0 %v1063
    %1085 = vmatpush.bf16.msra.mxu0 %v1062
    %1086 = vmatmul.bf16.gmra.mxu0 %v1010
    %v1087 = vpop.f32.mrf.mxu0
    %v1088 = vadd.f32 %v1029, %v1087
    %v1089 = vpop.f32.mrf.mxu0
    %v1090 = vadd.f32 %v1029, %v1089
    %1091 = vdwg.mxu0
    %v1092 = vmax.f32 %v1088, 0.0
    %v1093 = vmax.f32 %v1090, 0.0
    %v1094 = vpack.c.bf16 %v1093, %v1092
    %s1095 = scalar_lea.vmem [#allocation7], 384
    %v1096 = vld [vmem:[%s1095] sm:$0xf]
    %v1097 = vld [vmem:[%s1095 + $0x4] sm:$0xf]
    %v1098 = vld [vmem:[%s1095 + $0x8] sm:$0xf]
    %v1099 = vld [vmem:[%s1095 + $0xc] sm:$0xf]
    %v1100 = vld [vmem:[%s1095 + $0x10] sm:$0xf]
    %v1101 = vld [vmem:[%s1095 + $0x14] sm:$0xf]
    %v1102 = vld [vmem:[%s1095 + $0x18] sm:$0xf]
    %v1103 = vld [vmem:[%s1095 + $0x1c] sm:$0xf]
    %v1104 = vld [vmem:[%s1095 + $0x20] sm:$0xf]
    %v1105 = vld [vmem:[%s1095 + $0x24] sm:$0xf]
    %v1106 = vld [vmem:[%s1095 + $0x28] sm:$0xf]
    %v1107 = vld [vmem:[%s1095 + $0x2c] sm:$0xf]
    %v1108 = vld [vmem:[%s1095 + $0x30] sm:$0xf]
    %v1109 = vld [vmem:[%s1095 + $0x34] sm:$0xf]
    %v1110 = vld [vmem:[%s1095 + $0x38] sm:$0xf]
    %v1111 = vld [vmem:[%s1095 + $0x3c] sm:$0xf]
    %v1112 = vld [vmem:[%s4 + $0x7] sm:$0x1]
    %v1113 = vperm.slane %v1112, 0
    %v1130 = vunpack.c.l.b16 %v1096
    %v1131 = vunpack.c.l.b16 %v1097
    %v1132 = vunpack.c.l.b16 %v1098
    %v1133 = vunpack.c.l.b16 %v1099
    %v1134 = vunpack.c.l.b16 %v1100
    %v1135 = vunpack.c.l.b16 %v1101
    %v1136 = vunpack.c.l.b16 %v1102
    %v1137 = vunpack.c.l.b16 %v1103
    %v1138 = vunpack.c.l.b16 %v1104
    %v1139 = vunpack.c.l.b16 %v1105
    %v1140 = vunpack.c.l.b16 %v1106
    %v1141 = vunpack.c.l.b16 %v1107
    %v1142 = vunpack.c.l.b16 %v1108
    %v1143 = vunpack.c.l.b16 %v1109
    %v1144 = vunpack.c.l.b16 %v1110
    %v1145 = vunpack.c.l.b16 %v1111
    %v1146 = vpack.c.b16 %v1131, %v1130
    %v1147 = vpack.c.b16 %v1133, %v1132
    %v1148 = vpack.c.b16 %v1135, %v1134
    %v1149 = vpack.c.b16 %v1137, %v1136
    %v1150 = vpack.c.b16 %v1139, %v1138
    %v1151 = vpack.c.b16 %v1141, %v1140
    %v1152 = vpack.c.b16 %v1143, %v1142
    %v1153 = vpack.c.b16 %v1145, %v1144
    %1162 = vmatpush.bf16.msra.mxu0 %v1153
    %1163 = vmatpush.bf16.msra.mxu0 %v1152
    %1164 = vmatpush.bf16.msra.mxu0 %v1151
    %1165 = vmatpush.bf16.msra.mxu0 %v1150
    %1166 = vmatpush.bf16.msra.mxu0 %v1149
    %1167 = vmatpush.bf16.msra.mxu0 %v1148
    %1168 = vmatpush.bf16.msra.mxu0 %v1147
    %1169 = vmatpush.bf16.msra.mxu0 %v1146
    %1170 = vmatmul.bf16.gmra.mxu0 %v1094
    %v1171 = vpop.f32.mrf.mxu0
    %v1172 = vadd.f32 %v1113, %v1171
    %v1173 = vpop.f32.mrf.mxu0
    %v1174 = vadd.f32 %v1113, %v1173
    %1175 = vdwg.mxu0
    %v1176 = vmax.f32 %v1172, 0.0
    %v1177 = vmax.f32 %v1174, 0.0
    %v1178 = vpack.c.bf16 %v1177, %v1176
    %v1179 = vld [vmem:[%s3] sm:$0xf]
    %v1180 = vld [vmem:[%s3 + $0x4] sm:$0xf]
    %v1181 = vld [vmem:[%s3 + $0x8] sm:$0xf]
    %v1182 = vld [vmem:[%s3 + $0xc] sm:$0xf]
    %v1183 = vld [vmem:[%s3 + $0x10] sm:$0xf]
    %v1184 = vld [vmem:[%s3 + $0x14] sm:$0xf]
    %v1185 = vld [vmem:[%s3 + $0x18] sm:$0xf]
    %v1186 = vld [vmem:[%s3 + $0x1c] sm:$0xf]
    %v1187 = vld [vmem:[%s3 + $0x20] sm:$0xf]
    %v1188 = vld [vmem:[%s3 + $0x24] sm:$0xf]
    %v1189 = vld [vmem:[%s3 + $0x28] sm:$0xf]
    %v1190 = vld [vmem:[%s3 + $0x2c] sm:$0xf]
    %v1191 = vld [vmem:[%s3 + $0x30] sm:$0xf]
    %v1192 = vld [vmem:[%s3 + $0x34] sm:$0xf]
    %v1193 = vld [vmem:[%s3 + $0x38] sm:$0xf]
    %v1194 = vld [vmem:[%s3 + $0x3c] sm:$0xf]
    %v1195 = vld [vmem:[%s5] sm:$0x1]
    %v1197 = vperm.slane %v1195, 0
    %v1215 = vunpack.c.l.b16 %v1179
    %v1216 = vunpack.c.l.b16 %v1180
    %v1217 = vunpack.c.l.b16 %v1181
    %v1218 = vunpack.c.l.b16 %v1182
    %v1219 = vunpack.c.l.b16 %v1183
    %v1220 = vunpack.c.l.b16 %v1184
    %v1221 = vunpack.c.l.b16 %v1185
    %v1222 = vunpack.c.l.b16 %v1186
    %v1223 = vunpack.c.l.b16 %v1187
    %v1224 = vunpack.c.l.b16 %v1188
    %v1225 = vunpack.c.l.b16 %v1189
    %v1226 = vunpack.c.l.b16 %v1190
    %v1227 = vunpack.c.l.b16 %v1191
    %v1228 = vunpack.c.l.b16 %v1192
    %v1229 = vunpack.c.l.b16 %v1193
    %v1230 = vunpack.c.l.b16 %v1194
    %v1231 = vpack.c.b16 %v1216, %v1215
    %v1232 = vpack.c.b16 %v1218, %v1217
    %v1233 = vpack.c.b16 %v1220, %v1219
    %v1234 = vpack.c.b16 %v1222, %v1221
    %v1235 = vpack.c.b16 %v1224, %v1223
    %v1236 = vpack.c.b16 %v1226, %v1225
    %v1237 = vpack.c.b16 %v1228, %v1227
    %v1238 = vpack.c.b16 %v1230, %v1229
    %1247 = vmatpush.bf16.msra.mxu0 %v1238
    %1248 = vmatpush.bf16.msra.mxu0 %v1237
    %1249 = vmatpush.bf16.msra.mxu0 %v1236
    %1250 = vmatpush.bf16.msra.mxu0 %v1235
    %1251 = vmatpush.bf16.msra.mxu0 %v1234
    %1252 = vmatpush.bf16.msra.mxu0 %v1233
    %1253 = vmatpush.bf16.msra.mxu0 %v1232
    %1254 = vmatpush.bf16.msra.mxu0 %v1231
    %1255 = vmatmul.bf16.gmra.mxu0 %v1178
    %v1256 = vpop.f32.mrf.mxu0
    %v1257 = vadd.f32 %v1197, %v1256
    %v1258 = vpop.f32.mrf.mxu0
    %v1259 = vadd.f32 %v1197, %v1258
    %1260 = vdwg.mxu0
    %1261 = vst.msk [vmem:[#allocation8] sm:$0xff] %vm487, %v1257
    %1262 = vst.msk [vmem:[#allocation8 + $0x8] sm:$0xff] %vm487, %v1259
    // Predicated region
    $region38: #{tpu_custom_call.1} parent=1 // pred_check
      _
    $region39: #{tpu_custom_call.1} parent=1 // pred_check_branch
      %1264 = sbr.rel (0) target = $region41
    $region40: #{tpu_custom_call.1} parent=1 // pred_region
      %1266 = vsyncadd [#allocation4], 0
      %s1267 = sshll.u32 [#allocation8], 4
      %s1268 = int_to_ptr.vmem [resolvable:$true] %s1267
      %s1269 = sshll.u32 %s6, 4
      %s1270 = int_to_ptr.hbm [resolvable:$true] %s1269
      %1275 = dma.vmem_to_hbm [thread:$0]  %s1268, 256, %s1270, [#allocation4], 128, 128, 8
    $region41: #{tpu_custom_call.1} parent=1 // pred_fallthru
      _
    // Predicated region
    $region42: #{tpu_custom_call.1} parent=1 // pred_check
      _
    $region43: #{tpu_custom_call.1} parent=1 // pred_check_branch
      %1277 = sbr.rel (0) target = $region45
    $region44: #{tpu_custom_call.1} parent=1 // pred_region
      %1279 = dma.done [#allocation4], 256
    $region45: #{tpu_custom_call.1} parent=1 // pred_fallthru
      _
    %1280 = vsyncpa [#allocation3], 1
    %1281 = vsyncpa [#allocation6], 1
    %1282 = vsyncpa [#allocation4], 1

</llo_original>
